<compile_context>
chip_gen: v7x
topology: tpu7x:2x2x1
jax: 0.10.0
libtpu: 0.0.40
codegen_flags: <defaults>
</compile_context>

<pallas_src>
import math

import numpy as np

import jax
import jax.numpy as jnp
from jax import lax
from jax.experimental import pallas as pl
from jax.experimental.pallas import tpu as pltpu


def _round_up(x: int, m: int) -> int:
    return ((x + m - 1) // m) * m


def _make_sdpa_kernel(scale: float, compute_dtype, approx_recip: bool):
    """Build the flash-style SDPA kernel body (scale/dtype baked in at trace time)."""

    def kernel(q_ref, k_ref, v_ref, mask_ref, o_ref, m_sc, l_sc, acc_sc, qs_sc):
        kv = pl.program_id(2)

        @pl.when(kv == 0)
        def _init():
            m_sc[...] = jnp.full(m_sc.shape, -jnp.inf, dtype=m_sc.dtype)
            l_sc[...] = jnp.zeros(l_sc.shape, dtype=l_sc.dtype)
            acc_sc[...] = jnp.zeros(acc_sc.shape, dtype=acc_sc.dtype)
            # The q block index is kv-invariant: do the O(tq*D) scale+cast once
            # per q tile instead of every kv step.
            qs_sc[...] = (q_ref[0] * scale).astype(compute_dtype)

        q = qs_sc[...]                                        # (tq, Dp) compute_dtype
        k = k_ref[0].astype(compute_dtype)                    # (tk, Dp)

        # Contract last dims directly (no explicit k.T -> no XLU relayout).
        s = lax.dot_general(
            q, k,
            dimension_numbers=(((1,), (1,)), ((), ())),
            preferred_element_type=jnp.float32,
        )                                                     # (tq, tk) f32

        keep = mask_ref[0] != 0                               # int8 mask tile
        # Large finite negative instead of -inf: fully-masked rows stay NaN-free
        # (they output mean(V) rather than torch's NaN; padded rows are sliced).
        s = jnp.where(keep, s, -1e30)

        # Online softmax update (f32 scratch even when matmul inputs are bf16).
        m_prev = m_sc[...]
        m_new = jnp.maximum(m_prev, jnp.max(s, axis=-1, keepdims=True))
        alpha = jnp.exp(m_prev - m_new)
        p = jnp.exp(s - m_new)

        l_sc[...] = alpha * l_sc[...] + jnp.sum(p, axis=-1, keepdims=True)
        acc_sc[...] = alpha * acc_sc[...] + jnp.dot(
            p.astype(compute_dtype),
            v_ref[0].astype(compute_dtype),
            preferred_element_type=jnp.float32,
        )
        m_sc[...] = m_new

        @pl.when(kv == pl.num_programs(2) - 1)
        def _finalize():
            if approx_recip:
                inv_l = pl.reciprocal(l_sc[...], approx=True)   # EUP slot
            else:
                inv_l = 1.0 / l_sc[...]
            o_ref[0] = (acc_sc[...] * inv_l).astype(o_ref.dtype)

    return kernel


def scaled_dot_product_attention(q, k, v, mask, *, tq=256, tk=512,
                                 compute_dtype=None):
    """q (B,Sq,D), k/v (B,Sk,D), mask (B,Sq,Sk) bool (True == keep)."""
    B, Sq, D = q.shape
    _, Sk, _ = k.shape
    assert k.shape == v.shape and mask.shape == (B, Sq, Sk)

    # bf16 MXU operands with f32 accumulation is the default fast path on
    # v5e/v6e/v7x; pass compute_dtype=jnp.float32 for higher precision.
    if compute_dtype is None:
        compute_dtype = jnp.bfloat16
    approx_recip = np.dtype(compute_dtype) == np.dtype(jnp.bfloat16)

    scale = 1.0 / math.sqrt(D)   # scale uses the *original* head dim

    # Lane-dense head dim only when D is already >= 128; small D keeps its true
    # size (a block's last dim may equal the full array dim).
    Dp = _round_up(D, 128) if D >= 128 else D

    Sq8 = _round_up(Sq, 8)
    Sk8 = _round_up(Sk, 8)
    tq = min(tq, Sq8)
    tk = min(tk, Sk8)
    if tq < Sq8:
        tq = max(8, (tq // 8) * 8)          # second-minor dims: multiple of 8
    if tk < Sk8:
        tk = max(128, (tk // 128) * 128)    # mask tile's last dim: multiple of 128
    Sq_p = _round_up(Sq, tq)
    Sk_p = _round_up(Sk, tk)

    # Pad only when needed: each pad/slice is a full HBM pass outside the kernel.
    qp = q if (Sq_p == Sq and Dp == D) else jnp.pad(
        q, ((0, 0), (0, Sq_p - Sq), (0, Dp - D)))
    kp = k if (Sk_p == Sk and Dp == D) else jnp.pad(
        k, ((0, 0), (0, Sk_p - Sk), (0, Dp - D)))
    vp = v if (Sk_p == Sk and Dp == D) else jnp.pad(
        v, ((0, 0), (0, Sk_p - Sk), (0, Dp - D)))
    # int8 mask (padded kv positions are 0 == masked out so they never contribute).
    mp = mask.astype(jnp.int8)
    if Sq_p != Sq or Sk_p != Sk:
        mp = jnp.pad(mp, ((0, 0), (0, Sq_p - Sq), (0, Sk_p - Sk)))

    grid = (B, Sq_p // tq, Sk_p // tk)

    kernel = _make_sdpa_kernel(scale, compute_dtype, approx_recip)

    out = pl.pallas_call(
        kernel,
        out_shape=jax.ShapeDtypeStruct((B, Sq_p, Dp), q.dtype),
        grid_spec=pltpu.PrefetchScalarGridSpec(
            num_scalar_prefetch=0,
            grid=grid,
            in_specs=[
                pl.BlockSpec((1, tq, Dp), lambda b, qi, ki: (b, qi, 0)),   # q
                pl.BlockSpec((1, tk, Dp), lambda b, qi, ki: (b, ki, 0)),   # k
                pl.BlockSpec((1, tk, Dp), lambda b, qi, ki: (b, ki, 0)),   # v
                pl.BlockSpec((1, tq, tk), lambda b, qi, ki: (b, qi, ki)),  # mask
            ],
            out_specs=pl.BlockSpec((1, tq, Dp), lambda b, qi, ki: (b, qi, 0)),
            scratch_shapes=[
                pltpu.VMEM((tq, 1), jnp.float32),     # running max m
                pltpu.VMEM((tq, 1), jnp.float32),     # running denom l
                pltpu.VMEM((tq, Dp), jnp.float32),    # output accumulator
                pltpu.VMEM((tq, Dp), compute_dtype),  # pre-scaled/cast q tile
            ],
        ),
        compiler_params=pltpu.CompilerParams(
            dimension_semantics=("parallel", "parallel", "arbitrary"),
            # 32 MiB: above v5e's 16 MiB default scoped VMEM, well under v7x's
            # 64 MiB physical; the tq=256/tk=512 footprint is only a few MiB.
            vmem_limit_bytes=32 * 1024 * 1024,
        ),
    )(qp, kp, vp, mp)

    if Sq_p != Sq or Dp != D:
        out = out[:, :Sq, :D]
    return out


def _reference(q, k, v, mask):
    qk = jnp.einsum("bqd,bkd->bqk", q, k,
                    precision=lax.Precision.HIGHEST) / math.sqrt(q.shape[-1])
    qk = jnp.where(mask, qk, -jnp.inf)
    w = jax.nn.softmax(qk, axis=-1)
    return jnp.einsum("bqk,bkd->bqd", w, v, precision=lax.Precision.HIGHEST)


if __name__ == "__main__":
    B, S, D = 2, 8, 32
    key = jax.random.PRNGKey(0)
    kq, kk, kv_, km = jax.random.split(key, 4)

    q = jax.random.normal(kq, (B, S, D), dtype=jnp.float32)
    k = jax.random.normal(kk, (B, S, D), dtype=jnp.float32)
    v = jax.random.normal(kv_, (B, S, D), dtype=jnp.float32)
    # Random boolean mask; force the diagonal True so no row is fully masked
    # (matches the torch module, where a fully-masked row would be NaN).
    mask = jax.random.bernoulli(km, p=0.7, shape=(B, S, S))
    mask = mask | jnp.eye(S, dtype=jnp.bool_)[None, :, :]

    ref = _reference(q, k, v, mask)

    # Default fast path: bf16 MXU operands, f32 accumulation, approx reciprocal.
    out = jax.block_until_ready(scaled_dot_product_attention(q, k, v, mask))
    assert out.shape == (B, S, D)
    assert not bool(jnp.any(jnp.isnan(out)))
    assert jnp.allclose(out, ref, atol=3e-2, rtol=3e-2), "bf16 path mismatch vs reference"

    # Higher-precision path: f32 MXU operands (still bf16 multi-pass on the MXU).
    out_f32 = jax.block_until_ready(
        scaled_dot_product_attention(q, k, v, mask, compute_dtype=jnp.float32))
    assert not bool(jnp.any(jnp.isnan(out_f32)))
    assert jnp.allclose(out_f32, ref, atol=2e-2, rtol=2e-2), "f32 path mismatch vs reference"

    print("KERNEL_OK")
</pallas_src>

<mosaic_0001>
module attributes {stable_mosaic.version = 11 : i64} {
  func.func @kernel(%arg0: i32, %arg1: i32, %arg2: i32, %arg3: memref<1x8x32xf32, #tpu.memory_space<vmem>>, %arg4: memref<1x8x32xf32, #tpu.memory_space<vmem>>, %arg5: memref<1x8x32xf32, #tpu.memory_space<vmem>>, %arg6: memref<1x8x8xi8, #tpu.memory_space<vmem>>, %arg7: memref<1x8x32xf32, #tpu.memory_space<vmem>>, %arg8: memref<8x1xf32, #tpu.memory_space<vmem>>, %arg9: memref<8x1xf32, #tpu.memory_space<vmem>>, %arg10: memref<8x32xf32, #tpu.memory_space<vmem>>, %arg11: memref<8x32xbf16, #tpu.memory_space<vmem>>) attributes {dimension_semantics = [#tpu.dimension_semantics<parallel>, #tpu.dimension_semantics<parallel>, #tpu.dimension_semantics<arbitrary>], iteration_bounds = array<i64: 2, 1, 1>, scalar_prefetch = 0 : i64, scratch_operands = 4 : i64, tpu.core_type = #tpu.core_type<tc>, window_params = [{transform_indices = @transform_0, window_bounds = array<i64: 1, 8, 32>}, {transform_indices = @transform_1, window_bounds = array<i64: 1, 8, 32>}, {transform_indices = @transform_2, window_bounds = array<i64: 1, 8, 32>}, {transform_indices = @transform_3, window_bounds = array<i64: 1, 8, 8>}, {transform_indices = @transform_4, window_bounds = array<i64: 1, 8, 32>}]} {
    %c0_i32 = arith.constant 0 : i32
    %0 = arith.cmpi eq, %arg2, %c0_i32 : i32
    %1 = arith.extui %0 : i1 to i32
    %c0_i32_0 = arith.constant 0 : i32
    %2 = arith.cmpi ne, %1, %c0_i32_0 : i32
    scf.if %2 {
      %cst_29 = arith.constant 0xFF800000 : f32
      %43 = vector.broadcast %cst_29 : f32 to vector<8x1xf32>
      %c0_30 = arith.constant 0 : index
      %c0_31 = arith.constant 0 : index
      %44 = vector.load %arg8[%c0_30, %c0_31] : memref<8x1xf32, #tpu.memory_space<vmem>>, vector<8x1xf32>
      tpu.vector_store %arg8[%c0_30, %c0_31], %43 {strides = array<i32>} : memref<8x1xf32, #tpu.memory_space<vmem>>, vector<8x1xf32>,
      %cst_32 = arith.constant 0.000000e+00 : f32
      %45 = vector.broadcast %cst_32 : f32 to vector<8x1xf32>
      %c0_33 = arith.constant 0 : index
      %c0_34 = arith.constant 0 : index
      %46 = vector.load %arg9[%c0_33, %c0_34] : memref<8x1xf32, #tpu.memory_space<vmem>>, vector<8x1xf32>
      tpu.vector_store %arg9[%c0_33, %c0_34], %45 {strides = array<i32>} : memref<8x1xf32, #tpu.memory_space<vmem>>, vector<8x1xf32>,
      %cst_35 = arith.constant 0.000000e+00 : f32
      %47 = vector.broadcast %cst_35 : f32 to vector<8x32xf32>
      %c0_36 = arith.constant 0 : index
      %c0_37 = arith.constant 0 : index
      %48 = vector.load %arg10[%c0_36, %c0_37] : memref<8x32xf32, #tpu.memory_space<vmem>>, vector<8x32xf32>
      tpu.vector_store %arg10[%c0_36, %c0_37], %47 {strides = array<i32>} : memref<8x32xf32, #tpu.memory_space<vmem>>, vector<8x32xf32>,
      %c0_38 = arith.constant 0 : index
      %c0_39 = arith.constant 0 : index
      %c0_40 = arith.constant 0 : index
      %49 = vector.load %arg3[%c0_38, %c0_39, %c0_40] : memref<1x8x32xf32, #tpu.memory_space<vmem>>, vector<1x8x32xf32>
      %50 = vector.shape_cast %49 : vector<1x8x32xf32> to vector<8x32xf32>
      %cst_41 = arith.constant 0.176776692 : f32
      %51 = vector.broadcast %cst_41 : f32 to vector<8x32xf32>
      %52 = arith.mulf %50, %51 : vector<8x32xf32>
      %53 = arith.truncf %52 : vector<8x32xf32> to vector<8x32xbf16>
      %c0_42 = arith.constant 0 : index
      %c0_43 = arith.constant 0 : index
      %54 = vector.load %arg11[%c0_42, %c0_43] : memref<8x32xbf16, #tpu.memory_space<vmem>>, vector<8x32xbf16>
      tpu.vector_store %arg11[%c0_42, %c0_43], %53 {strides = array<i32>} : memref<8x32xbf16, #tpu.memory_space<vmem>>, vector<8x32xbf16>,
    } else {
    }
    %c0 = arith.constant 0 : index
    %c0_1 = arith.constant 0 : index
    %3 = vector.load %arg11[%c0, %c0_1] : memref<8x32xbf16, #tpu.memory_space<vmem>>, vector<8x32xbf16>
    %c0_2 = arith.constant 0 : index
    %c0_3 = arith.constant 0 : index
    %c0_4 = arith.constant 0 : index
    %4 = vector.load %arg4[%c0_2, %c0_3, %c0_4] : memref<1x8x32xf32, #tpu.memory_space<vmem>>, vector<1x8x32xf32>
    %5 = vector.shape_cast %4 : vector<1x8x32xf32> to vector<8x32xf32>
    %6 = arith.truncf %5 : vector<8x32xf32> to vector<8x32xbf16>
    %cst = arith.constant dense<0.000000e+00> : vector<8x8xf32>
    %7 = tpu.matmul %3, %6, %cst {dimension_numbers = #tpu.dot_dimension_numbers<[1], [1], [0], [0], [0, 0, 1, 0], [], []>} : vector<8x32xbf16>, vector<8x32xbf16>, vector<8x8xf32> -> vector<8x8xf32>
    %c0_5 = arith.constant 0 : index
    %c0_6 = arith.constant 0 : index
    %c0_7 = arith.constant 0 : index
    %8 = vector.load %arg6[%c0_5, %c0_6, %c0_7] : memref<1x8x8xi8, #tpu.memory_space<vmem>>, vector<1x8x8xi8>
    %9 = vector.shape_cast %8 : vector<1x8x8xi8> to vector<8x8xi8>
    %c0_i8 = arith.constant 0 : i8
    %10 = vector.broadcast %c0_i8 : i8 to vector<8x8xi8>
    %11 = arith.cmpi ne, %9, %10 : vector<8x8xi8>
    %cst_8 = arith.constant -1.000000e+30 : f32
    %12 = vector.broadcast %cst_8 : f32 to vector<8x8xf32>
    %13 = arith.select %11, %7, %12 : vector<8x8xi1>, vector<8x8xf32>
    %c0_9 = arith.constant 0 : index
    %c0_10 = arith.constant 0 : index
    %14 = vector.load %arg8[%c0_9, %c0_10] : memref<8x1xf32, #tpu.memory_space<vmem>>, vector<8x1xf32>
    %cst_11 = arith.constant dense<0xFF800000> : vector<8xf32>
    %15 = vector.multi_reduction <maximumf>, %13, %cst_11 [1] : vector<8x8xf32> to vector<8xf32>
    %16 = vector.shape_cast %15 : vector<8xf32> to vector<8x1xf32>
    %17 = arith.maximumf %14, %16 : vector<8x1xf32>
    %18 = arith.subf %14, %17 : vector<8x1xf32>
    %19 = math.exp %18 : vector<8x1xf32>
    %20 = vector.broadcast %17 : vector<8x1xf32> to vector<8x8xf32>
    %21 = arith.subf %13, %20 : vector<8x8xf32>
    %22 = math.exp %21 : vector<8x8xf32>
    %c0_12 = arith.constant 0 : index
    %c0_13 = arith.constant 0 : index
    %23 = vector.load %arg9[%c0_12, %c0_13] : memref<8x1xf32, #tpu.memory_space<vmem>>, vector<8x1xf32>
    %24 = arith.mulf %19, %23 : vector<8x1xf32>
    %cst_14 = arith.constant dense<0.000000e+00> : vector<8xf32>
    %25 = vector.multi_reduction <add>, %22, %cst_14 [1] : vector<8x8xf32> to vector<8xf32>
    %26 = vector.shape_cast %25 : vector<8xf32> to vector<8x1xf32>
    %27 = arith.addf %24, %26 : vector<8x1xf32>
    %c0_15 = arith.constant 0 : index
    %c0_16 = arith.constant 0 : index
    %28 = vector.load %arg9[%c0_15, %c0_16] : memref<8x1xf32, #tpu.memory_space<vmem>>, vector<8x1xf32>
    tpu.vector_store %arg9[%c0_15, %c0_16], %27 {strides = array<i32>} : memref<8x1xf32, #tpu.memory_space<vmem>>, vector<8x1xf32>,
    %c0_17 = arith.constant 0 : index
    %c0_18 = arith.constant 0 : index
    %29 = vector.load %arg10[%c0_17, %c0_18] : memref<8x32xf32, #tpu.memory_space<vmem>>, vector<8x32xf32>
    %30 = vector.broadcast %19 : vector<8x1xf32> to vector<8x32xf32>
    %31 = arith.mulf %30, %29 : vector<8x32xf32>
    %32 = arith.truncf %22 : vector<8x8xf32> to vector<8x8xbf16>
    %c0_19 = arith.constant 0 : index
    %c0_20 = arith.constant 0 : index
    %c0_21 = arith.constant 0 : index
    %33 = vector.load %arg5[%c0_19, %c0_20, %c0_21] : memref<1x8x32xf32, #tpu.memory_space<vmem>>, vector<1x8x32xf32>
    %34 = vector.shape_cast %33 : vector<1x8x32xf32> to vector<8x32xf32>
    %35 = arith.truncf %34 : vector<8x32xf32> to vector<8x32xbf16>
    %cst_22 = arith.constant dense<0.000000e+00> : vector<8x32xf32>
    %36 = tpu.matmul %32, %35, %cst_22 {dimension_numbers = #tpu.dot_dimension_numbers<[1], [0], [0], [1], [0, 0, 1, 1], [], []>} : vector<8x8xbf16>, vector<8x32xbf16>, vector<8x32xf32> -> vector<8x32xf32>
    %37 = arith.addf %31, %36 : vector<8x32xf32>
    %c0_23 = arith.constant 0 : index
    %c0_24 = arith.constant 0 : index
    %38 = vector.load %arg10[%c0_23, %c0_24] : memref<8x32xf32, #tpu.memory_space<vmem>>, vector<8x32xf32>
    tpu.vector_store %arg10[%c0_23, %c0_24], %37 {strides = array<i32>} : memref<8x32xf32, #tpu.memory_space<vmem>>, vector<8x32xf32>,
    %c0_25 = arith.constant 0 : index
    %c0_26 = arith.constant 0 : index
    %39 = vector.load %arg8[%c0_25, %c0_26] : memref<8x1xf32, #tpu.memory_space<vmem>>, vector<8x1xf32>
    tpu.vector_store %arg8[%c0_25, %c0_26], %17 {strides = array<i32>} : memref<8x1xf32, #tpu.memory_space<vmem>>, vector<8x1xf32>,
    %c0_i32_27 = arith.constant 0 : i32
    %40 = arith.cmpi eq, %arg2, %c0_i32_27 : i32
    %41 = arith.extui %40 : i1 to i32
    %c0_i32_28 = arith.constant 0 : i32
    %42 = arith.cmpi ne, %41, %c0_i32_28 : i32
    scf.if %42 {
      %c0_29 = arith.constant 0 : index
      %c0_30 = arith.constant 0 : index
      %43 = vector.load %arg9[%c0_29, %c0_30] : memref<8x1xf32, #tpu.memory_space<vmem>>, vector<8x1xf32>
      %44 = tpu.reciprocal %43 {approx = true} : vector<8x1xf32> -> vector<8x1xf32>
      %c0_31 = arith.constant 0 : index
      %c0_32 = arith.constant 0 : index
      %45 = vector.load %arg10[%c0_31, %c0_32] : memref<8x32xf32, #tpu.memory_space<vmem>>, vector<8x32xf32>
      %46 = vector.broadcast %44 : vector<8x1xf32> to vector<8x32xf32>
      %47 = arith.mulf %45, %46 : vector<8x32xf32>
      %c0_33 = arith.constant 0 : index
      %c0_34 = arith.constant 0 : index
      %c0_35 = arith.constant 0 : index
      %48 = vector.load %arg7[%c0_33, %c0_34, %c0_35] : memref<1x8x32xf32, #tpu.memory_space<vmem>>, vector<1x8x32xf32>
      %49 = vector.shape_cast %48 : vector<1x8x32xf32> to vector<8x32xf32>
      %50 = vector.shape_cast %47 : vector<8x32xf32> to vector<1x8x32xf32>
      tpu.vector_store %arg7[%c0_33, %c0_34, %c0_35], %50 {strides = array<i32>} : memref<1x8x32xf32, #tpu.memory_space<vmem>>, vector<1x8x32xf32>,
    } else {
    }
    return
  }
  func.func @transform_0(%arg0: i32, %arg1: i32, %arg2: i32) -> (i32, i32, i32) {
    %c0_i32 = arith.constant 0 : i32
    %c0_i32_0 = arith.constant 0 : i32
    return %arg0, %arg1, %c0_i32 : i32, i32, i32
  }
  func.func @transform_1(%arg0: i32, %arg1: i32, %arg2: i32) -> (i32, i32, i32) {
    %c0_i32 = arith.constant 0 : i32
    %c0_i32_0 = arith.constant 0 : i32
    return %arg0, %arg2, %c0_i32 : i32, i32, i32
  }
  func.func @transform_2(%arg0: i32, %arg1: i32, %arg2: i32) -> (i32, i32, i32) {
    %c0_i32 = arith.constant 0 : i32
    %c0_i32_0 = arith.constant 0 : i32
    return %arg0, %arg2, %c0_i32 : i32, i32, i32
  }
  func.func @transform_3(%arg0: i32, %arg1: i32, %arg2: i32) -> (i32, i32, i32) {
    %c0_i32 = arith.constant 0 : i32
    return %arg0, %arg1, %arg2 : i32, i32, i32
  }
  func.func @transform_4(%arg0: i32, %arg1: i32, %arg2: i32) -> (i32, i32, i32) {
    %c0_i32 = arith.constant 0 : i32
    %c0_i32_0 = arith.constant 0 : i32
    return %arg0, %arg1, %c0_i32 : i32, i32, i32
  }
}

</mosaic_0001>

<llo_original>
// kernel: tpu_custom_call.1
$region0: #{tpu_custom_call.1}
  #allocation0 [shape = 'u32[]', space=smem, size = 0x4, offset = 0x4, fixed_abs, tag = 'smem constant byte address 0x4 - core index']
  #allocation1 [shape = 'u32[144,128]{1,0:T(1,128)}', space=vmem, size = 0x12000, scoped, tag = 'internal scratch']
  #allocation2 [shape = 'f32[8,1]{1,0:T(8,128)}', space=vmem, size = 0x1000, scoped, tag = 'scratch operand']
  #allocation3 [shape = 'f32[8,1]{1,0:T(8,128)}', space=vmem, size = 0x1000, scoped, tag = 'scratch operand']
  #allocation4 [shape = 'f32[8,32]{1,0:T(8,128)}', space=vmem, size = 0x1000, scoped, tag = 'scratch operand']
  #allocation5 [shape = 'bf16[8,32]{1,0:T(8,128)(2,1)}', space=vmem, size = 0x800, scoped, tag = 'scratch operand']
  %s0 = inlined_call_operand.hbm [shape: f32[2,8,32], index: 0, kind: input, shape index: {}]
  %s1 = inlined_call_operand.hbm [shape: f32[2,8,32], index: 1, kind: input, shape index: {}]
  %s2 = inlined_call_operand.hbm [shape: f32[2,8,32], index: 2, kind: input, shape index: {}]
  %s3 = inlined_call_operand.vmem [shape: s8[2,8,8], index: 3, kind: input, shape index: {}]
  %s4 = inlined_call_operand.hbm [shape: f32[2,8,32], index: 4, kind: output, shape index: {}]
  %s5 = sld [smem:[#allocation0]]
  $region69: #{tpu_custom_call.1} parent=0
    _
  %s7 = ssub.s32 1, %s5
  %s8 = scalar_select 0, %s7, %s5
  $region1: #{tpu_custom_call.1} parent=0
    #allocation6 [shape = 'u8[8192]{0}', space=vmem, size = 0x2000, scoped, tag = 'input window, operand 0']
    #allocation7 [shape = 's32[2]{0}', space=sflag, size = 0x8, scoped, tag = 'scoped memory for tpu_custom_call.1']
    #allocation8 [shape = 's32[2]{0}', space=sflag, size = 0x8, scoped, tag = 'scoped memory for tpu_custom_call.1']
    #allocation9 [shape = 'u8[8192]{0}', space=vmem, size = 0x2000, scoped, tag = 'input window, operand 1']
    #allocation10 [shape = 's32[2]{0}', space=sflag, size = 0x8, scoped, tag = 'scoped memory for tpu_custom_call.1']
    #allocation11 [shape = 'u8[8192]{0}', space=vmem, size = 0x2000, scoped, tag = 'input window, operand 2']
    #allocation12 [shape = 'u8[8192]{0}', space=vmem, size = 0x2000, scoped, tag = 'output window, operand 0']
    %9 = vsyncpa [#allocation7], 0
    %s10 = scalar_lea.sflag [#allocation7], 1
    %11 = vsyncpa %s10, 0
    %12 = vsyncpa [#allocation10], 0
    %s13 = scalar_lea.sflag [#allocation10], 1
    %14 = vsyncpa %s13, 0
    %15 = vsyncpa [#allocation8], 0
    %s16 = scalar_lea.sflag [#allocation8], 1
    %17 = vsyncpa %s16, 0
    loop: start=0, step=1, limit=4
    $region2: #{tpu_custom_call.1} parent=1 // loop_pre_header
      _
    $region3: #{tpu_custom_call.1} parent=1 // loop_header
      %s19 = sphi 0, %s23
      %p20 = scmp.ge.s32.totalorder %s19, 4
      %s26 = sphi 0, %s45
      %s27 = sphi 0, %s41
      %s28 = sphi 0, %s37
      %s29 = sphi 0, %s26
      %s30 = sphi 0, %s27
      %s31 = sphi 0, %s28
      %s32 = sphi 0, %s29
      %s33 = sphi 0, %s30
      %s34 = sphi 0, %s31
      %s50 = sphi 0, %s52
      %s53 = sphi 0, %s50
      %s54 = sphi 0, %s53
      %s70 = sphi 0, %s54
      %s78 = sphi 0, %s80
      %s81 = sphi 0, %s78
      %s82 = sphi 0, %s81
      %s98 = sphi 0, %s82
      %s106 = sphi 0, %s108
      %s109 = sphi 0, %s106
      %s110 = sphi 0, %s109
      %s126 = sphi 0, %s110
      %s136 = sphi 0, %s138
      %s139 = sphi 0, %s136
      %s140 = sphi 0, %s139
      %s156 = sphi 0, %s140
      %s164 = sphi 0, %s166
      %s167 = sphi 0, %s164
      %s168 = sphi 0, %s167
      %s184 = sphi 0, %s168
    $region4: #{tpu_custom_call.1} parent=1 // loop_header_branch
      %22 = sbr.rel (%p20) target = $region8
    $region5: #{tpu_custom_call.1} parent=1 // loop_body
      %s24 = ssub.s32 %s19, 1
      %s25 = ssub.s32 %s19, 2
      %s35 = sadd.s32 1, %s28
      %p36 = scmp.ge.s32.totalorder %s35, 1
      %s37 = scalar_select %p36, 0, %s35
      %s38 = sadd.s32 1, %s27
      %s39 = scalar_select %p36, %s38, %s27
      %p40 = scmp.ge.s32.totalorder %s39, 1
      %s41 = scalar_select %p40, 0, %s39
      %s42 = sadd.s32 1, %s26
      %s43 = scalar_select %p40, %s42, %s26
      %p44 = scmp.ge.s32.totalorder %s43, 2
      %s45 = scalar_select %p44, 0, %s43
      %s46 = ssub.s32 %s26, %s45
      %s47 = ssub.s32 %s27, %s41
      %s48 = sor.u32 %s46, %s47
      %p49 = scmp.eq.s32.totalorder %s48, 0
      %s51 = sadd.s32 %s50, 1
      %s52 = scalar_select %p49, %s50, %s51
      %p55 = pneg %p49
      %p56 = scmp.eq.s32.totalorder %s19, 1
      %p57 = por %p55, %p56
      %p58 = scmp.ne.s32.totalorder %s50, %s53
      %p59 = scmp.eq.s32.totalorder %s19, 0
      %p60 = por %p58, %p59
      %p61 = scmp.ne.s32.totalorder %s50, %s53
      %p62 = scmp.eq.s32.totalorder %s24, 1
      %p63 = por %p61, %p62
      %p64 = scmp.ne.s32.totalorder %s53, %s54
      %p65 = scmp.eq.s32.totalorder %s24, 0
      %p66 = por %p64, %p65
      %p67 = scmp.ne.s32.totalorder %s53, %s54
      %p68 = scmp.eq.s32.totalorder %s25, 1
      %p69 = por %p67, %p68
      %p71 = scmp.ne.s32.totalorder %s54, %s70
      %p72 = scmp.eq.s32.totalorder %s25, 0
      %p73 = por %p71, %p72
      %s74 = ssub.s32 %s26, %s45
      %s75 = ssub.s32 %s28, %s37
      %s76 = sor.u32 %s74, %s75
      %p77 = scmp.eq.s32.totalorder %s76, 0
      %s79 = sadd.s32 %s78, 1
      %s80 = scalar_select %p77, %s78, %s79
      %p83 = pneg %p77
      %p84 = scmp.eq.s32.totalorder %s19, 1
      %p85 = por %p83, %p84
      %p86 = scmp.ne.s32.totalorder %s78, %s81
      %p87 = scmp.eq.s32.totalorder %s19, 0
      %p88 = por %p86, %p87
      %p89 = scmp.ne.s32.totalorder %s78, %s81
      %p90 = scmp.eq.s32.totalorder %s24, 1
      %p91 = por %p89, %p90
      %p92 = scmp.ne.s32.totalorder %s81, %s82
      %p93 = scmp.eq.s32.totalorder %s24, 0
      %p94 = por %p92, %p93
      %p95 = scmp.ne.s32.totalorder %s81, %s82
      %p96 = scmp.eq.s32.totalorder %s25, 1
      %p97 = por %p95, %p96
      %p99 = scmp.ne.s32.totalorder %s82, %s98
      %p100 = scmp.eq.s32.totalorder %s25, 0
      %p101 = por %p99, %p100
      %s102 = ssub.s32 %s26, %s45
      %s103 = ssub.s32 %s28, %s37
      %s104 = sor.u32 %s102, %s103
      %p105 = scmp.eq.s32.totalorder %s104, 0
      %s107 = sadd.s32 %s106, 1
      %s108 = scalar_select %p105, %s106, %s107
      %p111 = pneg %p105
      %p112 = scmp.eq.s32.totalorder %s19, 1
      %p113 = por %p111, %p112
      %p114 = scmp.ne.s32.totalorder %s106, %s109
      %p115 = scmp.eq.s32.totalorder %s19, 0
      %p116 = por %p114, %p115
      %p117 = scmp.ne.s32.totalorder %s106, %s109
      %p118 = scmp.eq.s32.totalorder %s24, 1
      %p119 = por %p117, %p118
      %p120 = scmp.ne.s32.totalorder %s109, %s110
      %p121 = scmp.eq.s32.totalorder %s24, 0
      %p122 = por %p120, %p121
      %p123 = scmp.ne.s32.totalorder %s109, %s110
      %p124 = scmp.eq.s32.totalorder %s25, 1
      %p125 = por %p123, %p124
      %p127 = scmp.ne.s32.totalorder %s110, %s126
      %p128 = scmp.eq.s32.totalorder %s25, 0
      %p129 = por %p127, %p128
      %s130 = ssub.s32 %s26, %s45
      %s131 = ssub.s32 %s27, %s41
      %s132 = sor.u32 %s130, %s131
      %s133 = ssub.s32 %s28, %s37
      %s134 = sor.u32 %s132, %s133
      %p135 = scmp.eq.s32.totalorder %s134, 0
      %s137 = sadd.s32 %s136, 1
      %s138 = scalar_select %p135, %s136, %s137
      %p141 = pneg %p135
      %p142 = scmp.eq.s32.totalorder %s19, 1
      %p143 = por %p141, %p142
      %p144 = scmp.ne.s32.totalorder %s136, %s139
      %p145 = scmp.eq.s32.totalorder %s19, 0
      %p146 = por %p144, %p145
      %p147 = scmp.ne.s32.totalorder %s136, %s139
      %p148 = scmp.eq.s32.totalorder %s24, 1
      %p149 = por %p147, %p148
      %p150 = scmp.ne.s32.totalorder %s139, %s140
      %p151 = scmp.eq.s32.totalorder %s24, 0
      %p152 = por %p150, %p151
      %p153 = scmp.ne.s32.totalorder %s139, %s140
      %p154 = scmp.eq.s32.totalorder %s25, 1
      %p155 = por %p153, %p154
      %p157 = scmp.ne.s32.totalorder %s140, %s156
      %p158 = scmp.eq.s32.totalorder %s25, 0
      %p159 = por %p157, %p158
      %s160 = ssub.s32 %s26, %s45
      %s161 = ssub.s32 %s27, %s41
      %s162 = sor.u32 %s160, %s161
      %p163 = scmp.eq.s32.totalorder %s162, 0
      %s165 = sadd.s32 %s164, 1
      %s166 = scalar_select %p163, %s164, %s165
      %p169 = pneg %p163
      %p170 = scmp.eq.s32.totalorder %s19, 1
      %p171 = por %p169, %p170
      %p172 = scmp.ne.s32.totalorder %s164, %s167
      %p173 = scmp.eq.s32.totalorder %s19, 0
      %p174 = por %p172, %p173
      %p175 = scmp.ne.s32.totalorder %s164, %s167
      %p176 = scmp.eq.s32.totalorder %s24, 1
      %p177 = por %p175, %p176
      %p178 = scmp.ne.s32.totalorder %s167, %s168
      %p179 = scmp.eq.s32.totalorder %s24, 0
      %p180 = por %p178, %p179
      %p181 = scmp.ne.s32.totalorder %s167, %s168
      %p182 = scmp.eq.s32.totalorder %s25, 1
      %p183 = por %p181, %p182
      %p185 = scmp.ne.s32.totalorder %s168, %s184
      %p186 = scmp.eq.s32.totalorder %s25, 0
      %p187 = por %p185, %p186
      %p188 = scmp.le.s32.totalorder 1, %s19
      %p189 = scmp.lt.s32.totalorder %s19, 3
      %p190 = pnand %p188, %p189
      %p191 = pneg %p190
      // Predicated region
      $region9: #{tpu_custom_call.1} parent=5 // pred_check
        _
      $region10: #{tpu_custom_call.1} parent=5 // pred_check_branch
        %193 = sbr.rel (%p190) target = $region12
      $region11: #{tpu_custom_call.1} parent=5 // pred_region
        %s194 = ssub.s32 %s19, 1
      $region12: #{tpu_custom_call.1} parent=5 // pred_fallthru
        _
      %p195 = scmp.lt.s32.totalorder %s19, 2
      // Predicated region
      $region13: #{tpu_custom_call.1} parent=5 // pred_check
        %p196 = pneg %p195
      $region14: #{tpu_custom_call.1} parent=5 // pred_check_branch
        %198 = sbr.rel (%p196) target = $region16
      $region15: #{tpu_custom_call.1} parent=5 // pred_region
        // Predicated region
        $region17: #{tpu_custom_call.1} parent=15 // pred_check
          %p199 = pneg %p60
        $region18: #{tpu_custom_call.1} parent=15 // pred_check_branch
          %201 = sbr.rel (%p199) target = $region20
        $region19: #{tpu_custom_call.1} parent=15 // pred_region
          %s202 = sand.u32 %s50, 1
          %s203 = scalar_lea.sflag [#allocation7], %s202
          %s204 = sand.u32 %s50, 1
          %s205 = smul.addr %s204, 8
          %s206 = scalar_lea.vmem [#allocation6], %s205
          %s208 = ssub.s32 128, 128
          %209 = vsyncadd %s203, %s208
          %s210 = sadd.s32 %s27, %s26
          %s211 = smul.addr %s210, 128
          %s212 = scalar_lea.hbm %s0, %s211
          %s214 = sshll.u32 %s206, 4
          %s215 = int_to_ptr.vmem [resolvable:$true] %s214
          %217 = dma.hbm_to_vmem [thread:$0]  %s212, 128, %s215, %s203
        $region20: #{tpu_custom_call.1} parent=15 // pred_fallthru
          _
        // Predicated region
        $region21: #{tpu_custom_call.1} parent=15 // pred_check
          %p218 = pneg %p88
        $region22: #{tpu_custom_call.1} parent=15 // pred_check_branch
          %220 = sbr.rel (%p218) target = $region24
        $region23: #{tpu_custom_call.1} parent=15 // pred_region
          %s221 = sand.u32 %s19, 1
          %s222 = scalar_lea.sflag [#allocation10], %s221
          %s223 = sand.u32 %s78, 1
          %s224 = smul.addr %s223, 8
          %s225 = scalar_lea.vmem [#allocation9], %s224
          %s227 = ssub.s32 128, 128
          %228 = vsyncadd %s222, %s227
          %s229 = sadd.s32 %s28, %s26
          %s230 = smul.addr %s229, 128
          %s231 = scalar_lea.hbm %s1, %s230
          %s233 = sshll.u32 %s225, 4
          %s234 = int_to_ptr.vmem [resolvable:$true] %s233
          %236 = dma.hbm_to_vmem [thread:$0]  %s231, 128, %s234, %s222
        $region24: #{tpu_custom_call.1} parent=15 // pred_fallthru
          _
        // Predicated region
        $region25: #{tpu_custom_call.1} parent=15 // pred_check
          %p237 = pneg %p116
        $region26: #{tpu_custom_call.1} parent=15 // pred_check_branch
          %239 = sbr.rel (%p237) target = $region28
        $region27: #{tpu_custom_call.1} parent=15 // pred_region
          %s240 = sand.u32 %s19, 1
          %s241 = scalar_lea.sflag [#allocation10], %s240
          %s242 = sand.u32 %s106, 1
          %s243 = smul.addr %s242, 8
          %s244 = scalar_lea.vmem [#allocation11], %s243
          %s246 = ssub.s32 128, 128
          %247 = vsyncadd %s241, %s246
          %s248 = sadd.s32 %s28, %s26
          %s249 = smul.addr %s248, 128
          %s250 = scalar_lea.hbm %s2, %s249
          %s252 = sshll.u32 %s244, 4
          %s253 = int_to_ptr.vmem [resolvable:$true] %s252
          %255 = dma.hbm_to_vmem [thread:$0]  %s250, 128, %s253, %s241
        $region28: #{tpu_custom_call.1} parent=15 // pred_fallthru
          _
        // Predicated region
        $region29: #{tpu_custom_call.1} parent=15 // pred_check
          %p256 = pneg %p146
        $region30: #{tpu_custom_call.1} parent=15 // pred_check_branch
          %258 = sbr.rel (%p256) target = $region32
        $region31: #{tpu_custom_call.1} parent=15 // pred_region
          %p259 = scmp.lt.s32.totalorder %s26, 1
          %s260 = scalar_select %p259, %s26, 1
          %p261 = scmp.lt.s32.totalorder %s27, 0
          %s262 = scalar_select %p261, %s27, 0
          %p263 = scmp.lt.s32.totalorder %s28, 0
          %s264 = scalar_select %p263, %s28, 0
          %s265 = sadd.s32 %s264, %s262
          %s266 = sadd.s32 %s265, %s260
          %s267 = smul.addr %s266, 2
          %s268 = scalar_lea.vmem %s3, %s267
        $region32: #{tpu_custom_call.1} parent=15 // pred_fallthru
          _
      $region16: #{tpu_custom_call.1} parent=5 // pred_fallthru
        _
      %p269 = scmp.le.s32.totalorder 1, %s19
      %p270 = scmp.lt.s32.totalorder %s19, 3
      %p271 = pnand %p269, %p270
      %p272 = pneg %p271
      // Predicated region
      $region33: #{tpu_custom_call.1} parent=5 // pred_check
        _
      $region34: #{tpu_custom_call.1} parent=5 // pred_check_branch
        %274 = sbr.rel (%p271) target = $region36
      $region35: #{tpu_custom_call.1} parent=5 // pred_region
        %s275 = ssub.s32 %s19, 1
        %s276 = sand.u32 %s53, 1
        %s277 = scalar_lea.sflag [#allocation7], %s276
        %s278 = sand.u32 %s53, 1
        %s279 = smul.addr %s278, 8
        %s280 = scalar_lea.vmem [#allocation6], %s279
        // Predicated region
        $region37: #{tpu_custom_call.1} parent=35 // pred_check
          %p281 = pneg %p66
        $region38: #{tpu_custom_call.1} parent=35 // pred_check_branch
          %283 = sbr.rel (%p281) target = $region40
        $region39: #{tpu_custom_call.1} parent=35 // pred_region
          %284 = dma.done %s277, 128
        $region40: #{tpu_custom_call.1} parent=35 // pred_fallthru
          _
        %s285 = sand.u32 %s24, 1
        %s286 = scalar_lea.sflag [#allocation10], %s285
        %s287 = sand.u32 %s81, 1
        %s288 = smul.addr %s287, 8
        %s289 = scalar_lea.vmem [#allocation9], %s288
        // Predicated region
        $region41: #{tpu_custom_call.1} parent=35 // pred_check
          %p290 = pneg %p94
        $region42: #{tpu_custom_call.1} parent=35 // pred_check_branch
          %292 = sbr.rel (%p290) target = $region44
        $region43: #{tpu_custom_call.1} parent=35 // pred_region
          %293 = dma.done %s286, 128
        $region44: #{tpu_custom_call.1} parent=35 // pred_fallthru
          _
        %s294 = sand.u32 %s24, 1
        %s295 = scalar_lea.sflag [#allocation10], %s294
        %s296 = sand.u32 %s109, 1
        %s297 = smul.addr %s296, 8
        %s298 = scalar_lea.vmem [#allocation11], %s297
        // Predicated region
        $region45: #{tpu_custom_call.1} parent=35 // pred_check
          %p299 = pneg %p122
        $region46: #{tpu_custom_call.1} parent=35 // pred_check_branch
          %301 = sbr.rel (%p299) target = $region48
        $region47: #{tpu_custom_call.1} parent=35 // pred_region
          %302 = dma.done %s295, 128
        $region48: #{tpu_custom_call.1} parent=35 // pred_fallthru
          _
        %s303 = sand.u32 %s53, 1
        %s304 = scalar_lea.sflag [#allocation7], %s303
        %s305 = sand.u32 %s53, 1
        %s306 = smul.addr %s305, 8
        %s307 = scalar_lea.vmem [#allocation6], %s306
        %p308 = pneg %p66
        %p309 = pneg %p63
        %s310 = sand.u32 %s24, 1
        %s311 = scalar_lea.sflag [#allocation10], %s310
        %s312 = sand.u32 %s81, 1
        %s313 = smul.addr %s312, 8
        %s314 = scalar_lea.vmem [#allocation9], %s313
        %p315 = pneg %p94
        %p316 = pneg %p91
        %s317 = sand.u32 %s24, 1
        %s318 = scalar_lea.sflag [#allocation10], %s317
        %s319 = sand.u32 %s109, 1
        %s320 = smul.addr %s319, 8
        %s321 = scalar_lea.vmem [#allocation11], %s320
        %p322 = pneg %p122
        %p323 = pneg %p119
        %p324 = scmp.lt.s32.totalorder %s29, 1
        %s325 = scalar_select %p324, %s29, 1
        %p326 = scmp.lt.s32.totalorder %s30, 0
        %s327 = scalar_select %p326, %s30, 0
        %p328 = scmp.lt.s32.totalorder %s31, 0
        %s329 = scalar_select %p328, %s31, 0
        %s330 = sadd.s32 %s329, %s327
        %s331 = sadd.s32 %s330, %s325
        %s332 = smul.addr %s331, 2
        %s333 = scalar_lea.vmem %s3, %s332
        %p334 = pneg %p152
        %p335 = pneg %p149
        %p336 = pneg %p180
        %p337 = pneg %p177
        %s338 = sand.u32 %s167, 1
        %s339 = scalar_lea.sflag [#allocation8], %s338
        %s340 = sand.u32 %s167, 1
        %s341 = smul.addr %s340, 8
        %s342 = scalar_lea.vmem [#allocation12], %s341
        %p343 = scmp.lt.s32.totalorder %s29, 1
        %s344 = scalar_select %p343, %s29, 1
        %p345 = scmp.lt.s32.totalorder %s30, 0
        %s346 = scalar_select %p345, %s30, 0
        %p347 = scmp.lt.s32.totalorder %s31, 0
        %s348 = scalar_select %p347, %s31, 0
        %s349 = sadd.s32 %s348, %s346
        %s350 = sadd.s32 %s349, %s344
        %s351 = smul.addr %s350, 2
        %s352 = scalar_lea.vmem %s3, %s351
        %p356 = scmp.eq.s32.totalorder %s31, 0
        // Predicated region
        $region49: #{tpu_custom_call.1} parent=35 // pred_check
          %p357 = pneg %p356
        $region50: #{tpu_custom_call.1} parent=35 // pred_check_branch
          %359 = sbr.rel (%p357) target = $region52
        $region51: #{tpu_custom_call.1} parent=35 // pred_region
          %vm360 = vcmask 7168
          %361 = vst.msk [vmem:[#allocation2] sm:$0xff] %vm360, -inf
          %362 = vst.msk [vmem:[#allocation3] sm:$0xff] %vm360, 0.0
          %vm363 = vcmask 261120
          %364 = vst.msk [vmem:[#allocation4] sm:$0xff] %vm363, 0.0
          %v365 = vld [vmem:[%s280] sm:$0xff]
          %v366 = vmul.f32 %v365, 0.17677669
          %v367 = vpack.c.bf16 %v366, %v366
          %vm368 = vcmask 257024
          %369 = vst.msk [vmem:[#allocation5] sm:$0xf] %vm368, %v367
        $region52: #{tpu_custom_call.1} parent=35 // pred_fallthru
          _
        %v370 = vld [vmem:[#allocation5] sm:$0xf]
        %v371 = vld [vmem:[%s289] sm:$0xff]
        %v372 = vpack.c.bf16 %v371, %v371
        %vm373 = vcmask 261120
        %v375 = vsel %vm373, %v370, 0
        %v378 = vsel %vm373, %v372, 0
        %380 = vmatprep.subr.bf16.mxu0 0
        %381 = vmatpush1.bf16.xpose.msra.mxu0 %v378
        %382 = vmatprep.subr.bf16.mxu0 0
        %383 = vmatpush1.bf16.xpose.msra.mxu0 0
        %384 = vmatprep.subr.bf16.mxu0 0
        %385 = vmatpush1.bf16.xpose.msra.mxu0 0
        %386 = vmatprep.subr.bf16.mxu0 0
        %387 = vmatpush1.bf16.xpose.msra.mxu0 0
        %388 = vmatprep.subr.bf16.mxu0 0
        %389 = vmatpush1.bf16.xpose.msra.mxu0 0
        %390 = vmatprep.subr.bf16.mxu0 0
        %391 = vmatpush1.bf16.xpose.msra.mxu0 0
        %392 = vmatprep.subr.bf16.mxu0 0
        %393 = vmatpush1.bf16.xpose.msra.mxu0 0
        %394 = vmatprep.subr.bf16.mxu0 0
        %395 = vmatpush1.bf16.xpose.msra.mxu0 0
        %396 = vmatprep.subr.bf16.mxu0 0
        %397 = vmatpush1.bf16.xpose.msra.mxu0 0
        %398 = vmatprep.subr.bf16.mxu0 0
        %399 = vmatpush1.bf16.xpose.msra.mxu0 0
        %400 = vmatprep.subr.bf16.mxu0 0
        %401 = vmatpush1.bf16.xpose.msra.mxu0 0
        %402 = vmatprep.subr.bf16.mxu0 0
        %403 = vmatpush1.bf16.xpose.msra.mxu0 0
        %404 = vmatprep.subr.bf16.mxu0 0
        %405 = vmatpush1.bf16.xpose.msra.mxu0 0
        %406 = vmatprep.subr.bf16.mxu0 0
        %407 = vmatpush1.bf16.xpose.msra.mxu0 0
        %408 = vmatprep.subr.bf16.mxu0 0
        %409 = vmatpush1.bf16.xpose.msra.mxu0 0
        %410 = vmatprep.subr.bf16.mxu0 0
        %411 = vmatpush1.bf16.xpose.msra.mxu0 0
        %412 = vmatprep.mubr.bf16.mxu0 0
        %413 = vmatmul.mubr.bf16.gmra.mrb[0].mxu0 %v375
        %v414 = vpop.f32.mrb[0].mxu0
        %v415 = vadd.f32 0.0, %v414
        %v416 = vpop.f32.mrb[0].mxu0
        %v417 = vpop.f32.mrb[0].mxu0
        %v418 = vpop.f32.mrb[0].mxu0
        %419 = vdwg.mxu0
        %v420 = vld [vmem:[%s352] sm:$0x3]
        %vm421 = vnez %v420
        %v422 = vsel %vm421, 16843009, 0
        %v423 = vunpack.c.0.s8 %v422
        %vm424 = vcmp.ne.s32.totalorder %v423, 0
        %v425 = vsel %vm424, %v415, -1e+30
        %v426 = vld [vmem:[#allocation2] sm:$0xff]
        %vm427 = vcmask 64512
        %v428 = vsel %vm427, %v425, -inf
        %429 = vmax.xlane.f32.xlu0 %v428
        %v430 = vpop.xlane.xlu0 %429
        %v431 = vmax.f32 %v426, %v430
        %v432 = vsub.f32 %v426, %v431
        %v433 = vmul.f32 %v432, 1.442695
        %v434 = vpow.pop %v433
        %436 = vset.pattern.permute.xlu0 0
        %437 = vperm.xlu0 %436, %v431
        %v438 = vpop.permute.xlu0 %437
        %v440 = vsub.f32 %v425, %v438
        %v441 = vmul.f32 %v440, 1.442695
        %v442 = vpow.pop %v441
        %v443 = vld [vmem:[#allocation3] sm:$0xff]
        %v444 = vmul.f32 %v434, %v443
        %v445 = vsel %vm427, %v442, 0.0
        %446 = vadd.xlane.f32.xlu0 %v445
        %v447 = vpop.xlane.xlu0 %446
        %v448 = vadd.f32 %v444, %v447
        %vm449 = vcmask 7168
        %450 = vst.msk [vmem:[#allocation3] sm:$0xff] %vm449, %v448
        %v451 = vld [vmem:[#allocation4] sm:$0xff]
        %453 = vset.pattern.permute.xlu0 0
        %454 = vperm.xlu0 %453, %v434
        %v455 = vpop.permute.xlu0 %454
        %v457 = vmul.f32 %v455, %v451
        %v458 = vpack.c.bf16 %v442, %v442
        %v459 = vld [vmem:[%s298] sm:$0xff]
        %v460 = vpack.c.bf16 %v459, %v459
        %v462 = vsel %vm427, %v458, 0
        %vm464 = vcmask 1043456
        %v466 = vsel %vm464, %v460, 0
        %468 = vmatprep.subr.bf16.mxu0 0
        %469 = vmatpush1.bf16.msra.mxu0 %v466
        %470 = vmatprep.subr.bf16.mxu0 0
        %471 = vmatpush1.bf16.msra.mxu0 0
        %472 = vmatprep.subr.bf16.mxu0 0
        %473 = vmatpush1.bf16.msra.mxu0 0
        %474 = vmatprep.subr.bf16.mxu0 0
        %475 = vmatpush1.bf16.msra.mxu0 0
        %476 = vmatprep.subr.bf16.mxu0 0
        %477 = vmatpush1.bf16.msra.mxu0 0
        %478 = vmatprep.subr.bf16.mxu0 0
        %479 = vmatpush1.bf16.msra.mxu0 0
        %480 = vmatprep.subr.bf16.mxu0 0
        %481 = vmatpush1.bf16.msra.mxu0 0
        %482 = vmatprep.subr.bf16.mxu0 0
        %483 = vmatpush1.bf16.msra.mxu0 0
        %484 = vmatprep.subr.bf16.mxu0 0
        %485 = vmatpush1.bf16.msra.mxu0 0
        %486 = vmatprep.subr.bf16.mxu0 0
        %487 = vmatpush1.bf16.msra.mxu0 0
        %488 = vmatprep.subr.bf16.mxu0 0
        %489 = vmatpush1.bf16.msra.mxu0 0
        %490 = vmatprep.subr.bf16.mxu0 0
        %491 = vmatpush1.bf16.msra.mxu0 0
        %492 = vmatprep.subr.bf16.mxu0 0
        %493 = vmatpush1.bf16.msra.mxu0 0
        %494 = vmatprep.subr.bf16.mxu0 0
        %495 = vmatpush1.bf16.msra.mxu0 0
        %496 = vmatprep.subr.bf16.mxu0 0
        %497 = vmatpush1.bf16.msra.mxu0 0
        %498 = vmatprep.subr.bf16.mxu0 0
        %499 = vmatpush1.bf16.msra.mxu0 0
        %500 = vmatprep.mubr.bf16.mxu0 0
        %501 = vmatmul.mubr.bf16.gmra.mrb[0].mxu0 %v462
        %v502 = vpop.f32.mrb[0].mxu0
        %v503 = vadd.f32 0.0, %v502
        %v504 = vpop.f32.mrb[0].mxu0
        %v505 = vpop.f32.mrb[0].mxu0
        %v506 = vpop.f32.mrb[0].mxu0
        %507 = vdwg.mxu0
        %v508 = vadd.f32 %v457, %v503
        %509 = vst.msk [vmem:[#allocation4] sm:$0xff] %vm373, %v508
        %510 = vst.msk [vmem:[#allocation2] sm:$0xff] %vm449, %v431
        // Predicated region
        $region53: #{tpu_custom_call.1} parent=35 // pred_check
          %p511 = pneg %p356
        $region54: #{tpu_custom_call.1} parent=35 // pred_check_branch
          %513 = sbr.rel (%p511) target = $region56
        $region55: #{tpu_custom_call.1} parent=35 // pred_region
          %v514 = vld [vmem:[#allocation3] sm:$0xff]
          %v515 = vrcp.pop %v514
          %v516 = vld [vmem:[#allocation4] sm:$0xff]
          %518 = vset.pattern.permute.xlu0 0
          %519 = vperm.xlu0 %518, %v515
          %v520 = vpop.permute.xlu0 %519
          %v522 = vmul.f32 %v516, %v520
          %523 = vst.msk [vmem:[%s342] sm:$0xff] %vm373, %v522
        $region56: #{tpu_custom_call.1} parent=35 // pred_fallthru
          _
        %s524 = sand.u32 %s167, 1
        %s525 = scalar_lea.sflag [#allocation8], %s524
        %s526 = sand.u32 %s167, 1
        %s527 = smul.addr %s526, 8
        %s528 = scalar_lea.vmem [#allocation12], %s527
        // Predicated region
        $region57: #{tpu_custom_call.1} parent=35 // pred_check
          %p529 = pneg %p177
        $region58: #{tpu_custom_call.1} parent=35 // pred_check_branch
          %531 = sbr.rel (%p529) target = $region60
        $region59: #{tpu_custom_call.1} parent=35 // pred_region
          %s533 = ssub.s32 128, 128
          %534 = vsyncadd %s525, %s533
          %s535 = sadd.s32 %s30, %s29
          %s536 = smul.addr %s535, 128
          %s537 = scalar_lea.hbm %s4, %s536
          %s539 = sshll.u32 %s528, 4
          %s540 = int_to_ptr.vmem [resolvable:$true] %s539
          %542 = dma.vmem_to_hbm [thread:$0]  %s540, 128, %s537, %s525
        $region60: #{tpu_custom_call.1} parent=35 // pred_fallthru
          _
      $region36: #{tpu_custom_call.1} parent=5 // pred_fallthru
        _
      %p543 = scmp.le.s32.totalorder 2, %s19
      // Predicated region
      $region61: #{tpu_custom_call.1} parent=5 // pred_check
        %p544 = pneg %p543
      $region62: #{tpu_custom_call.1} parent=5 // pred_check_branch
        %546 = sbr.rel (%p544) target = $region64
      $region63: #{tpu_custom_call.1} parent=5 // pred_region
        %s547 = ssub.s32 %s19, 2
        // Predicated region
        $region65: #{tpu_custom_call.1} parent=63 // pred_check
          %p548 = pneg %p183
        $region66: #{tpu_custom_call.1} parent=63 // pred_check_branch
          %550 = sbr.rel (%p548) target = $region68
        $region67: #{tpu_custom_call.1} parent=63 // pred_region
          %s551 = sand.u32 %s168, 1
          %s552 = scalar_lea.sflag [#allocation8], %s551
          %s553 = sand.u32 %s168, 1
          %s554 = smul.addr %s553, 8
          %s555 = scalar_lea.vmem [#allocation12], %s554
          %556 = dma.done %s552, 128
        $region68: #{tpu_custom_call.1} parent=63 // pred_fallthru
          _
      $region64: #{tpu_custom_call.1} parent=5 // pred_fallthru
        _
    $region6: #{tpu_custom_call.1} parent=1 // loop_footer
      %s23 = sadd.s32 1, %s19
    $region7: #{tpu_custom_call.1} parent=1 // loop_footer_branch
      %18 = sbr.rel target = $region3
    $region8: #{tpu_custom_call.1} parent=1 // loop_exit
      _
    %557 = vsyncpa [#allocation7], 1
    %s558 = scalar_lea.sflag [#allocation7], 1
    %559 = vsyncpa %s558, 1
    %560 = vsyncpa [#allocation10], 1
    %s561 = scalar_lea.sflag [#allocation10], 1
    %562 = vsyncpa %s561, 1
    %563 = vsyncpa [#allocation8], 1
    %s564 = scalar_lea.sflag [#allocation8], 1
    %565 = vsyncpa %s564, 1

</llo_original>
